<compile_context>
chip_gen: v5e
topology: v5e:2x2
jax: 0.10.0
libtpu: 0.0.40
codegen_flags: <defaults>
</compile_context>

<pallas_src>
import functools

import jax
import jax.numpy as jnp
from jax.experimental import pallas as pl
from jax.experimental.pallas import tpu as pltpu

LANES = 128                      # vreg lane width
ACC_ROWS = 8                     # per-core accumulator = one (8, 128) f32 vreg
CHUNK_ROWS = 512                 # inner compute strip (bounds VMEM temporaries)
VMEM_LIMIT_BYTES = 32 * 1024 * 1024   # explicit: v5e scoped default is only 16 MiB


def _tpu_generation():
    """Best-effort TPU generation ('v5', 'v6', 'v7') or None."""
    try:
        kind = jax.devices()[0].device_kind.lower()
    except Exception:
        return None
    for gen in ("v7", "v6", "v5"):
        if gen in kind:
            return gen
    return None


def _tile_config():
    """(rows_per_block, n_cores) tuned per generation.

    v7x : 2 TCs/chip, ~3.2 TB/s per TC -> 4 MiB blocks + 2-way core split
          (2 inputs x 2 buffers x 4 MiB = 16 MiB VMEM).
    v6e / v5e : single TC -> no core split; 2 MiB blocks amortize the ~0.35 us
          per-step grid overhead (8 MiB double-buffered).
    """
    gen = _tpu_generation()
    if gen == "v7":
        return 8192, 2
    if gen in ("v6", "v5"):
        return 4096, 1
    return 2048, 1  # unknown backend: conservative


def _bin_loss_kernel(hard_ref, soft_ref, logsum_ref, hardsum_ref, *,
                     tm, chunk, bpc, rows_valid):
    c = pl.program_id(0)   # core-split axis ("parallel"; only >1 on v7x)
    i = pl.program_id(1)   # sequential reduction axis over row-blocks

    @pl.when(i == 0)
    def _():
        logsum_ref[...] = jnp.zeros_like(logsum_ref)
        hardsum_ref[...] = jnp.zeros_like(hardsum_ref)

    block_row0 = (c * bpc + i) * tm
    n_chunks = tm // chunk   # static Python int

    def chunk_partials(r0, masked):
        """(8,128) partial sums for one `chunk`-row strip of the block."""
        # Native-dtype stream; cast on the VPU (free under the memory bound).
        hard = hard_ref[pl.ds(r0, chunk), :].astype(jnp.float32)
        soft = soft_ref[pl.ds(r0, chunk), :].astype(jnp.float32)
        log_soft = jnp.log(jnp.maximum(soft, jnp.float32(1e-12)))
        sel = hard == jnp.float32(1.0)          # exact "hard == 1" semantics
        hard_c = hard
        if masked:
            # Ragged tail / clamped overshoot block: zero out-of-range rows.
            # jnp.where is a select, so NaNs in Pallas-padded garbage rows
            # never propagate into the taken branch.
            rows_left = rows_valid - (block_row0 + r0)
            row_ids = jax.lax.broadcasted_iota(jnp.int32, (chunk, LANES), 0)
            in_bounds = row_ids < rows_left
            sel = sel & in_bounds
            hard_c = jnp.where(in_bounds, hard, jnp.float32(0.0))
        log_c = jnp.where(sel, log_soft, jnp.float32(0.0))

        if chunk % ACC_ROWS == 0:
            # (chunk,128) -> (chunk/8, 8, 128), sum leading axis: pure VPU adds.
            p_log = jnp.sum(log_c.reshape(chunk // ACC_ROWS, ACC_ROWS, LANES), axis=0)
            p_hard = jnp.sum(hard_c.reshape(chunk // ACC_ROWS, ACC_ROWS, LANES), axis=0)
        else:
            # Tiny-input fallback (< 8-row granularity).
            sub = jax.lax.broadcasted_iota(jnp.int32, (ACC_ROWS, LANES), 0)
            p_log = jnp.where(sub == 0,
                              jnp.sum(log_c, axis=0, keepdims=True),
                              jnp.float32(0.0))
            p_hard = jnp.where(sub == 0,
                               jnp.sum(hard_c, axis=0, keepdims=True),
                               jnp.float32(0.0))
        return p_log, p_hard

    def block_partials(masked):
        if n_chunks == 1:
            return chunk_partials(0, masked)

        def body(j, carry):
            acc_log, acc_hard = carry
            r0 = pl.multiple_of(j * chunk, chunk)
            p_log, p_hard = chunk_partials(r0, masked)
            return acc_log + p_log, acc_hard + p_hard

        init = (jnp.zeros((ACC_ROWS, LANES), jnp.float32),
                jnp.zeros((ACC_ROWS, LANES), jnp.float32))
        return jax.lax.fori_loop(0, n_chunks, body, init, unroll=True)

    fully_valid = (block_row0 + tm) <= rows_valid

    @pl.when(fully_valid)
    def _():
        # Hot path: no iota, no row mask, no extra selects.
        p_log, p_hard = block_partials(masked=False)
        logsum_ref[...] += p_log
        hardsum_ref[...] += p_hard

    @pl.when(jnp.logical_not(fully_valid))
    def _():
        # Rare path: at most one ragged tail block + one clamped overshoot block.
        p_log, p_hard = block_partials(masked=True)
        logsum_ref[...] += p_log
        hardsum_ref[...] += p_hard


def bin_loss(hard_attention, soft_attention):
    """Pallas implementation of BinLoss.forward. Returns a scalar float32.

    `hard_attention` may be any dtype with {0,1} values (bool/int8/f32, ...);
    `soft_attention` may be bf16/f32 — both stream in native dtype and are
    cast to f32 inside the kernel.
    """
    hard = jnp.ravel(jnp.asarray(hard_attention))   # keep native dtype
    soft = jnp.ravel(jnp.asarray(soft_attention))
    n = hard.shape[0]

    # Only pad the sub-128 tail so the flat stream can be viewed as (rows,128).
    pad = (-n) % LANES
    if pad:
        hard = jnp.pad(hard, (0, pad))                      # hard pad = 0 -> excluded
        soft = jnp.pad(soft, (0, pad), constant_values=1)   # log(1) = 0, never selected
    rows = (n + pad) // LANES

    hard2d = hard.reshape(rows, LANES)
    soft2d = soft.reshape(rows, LANES)

    tm_max, ncores = _tile_config()
    tm = min(tm_max, rows)                    # full-dim block for small inputs
    chunk = CHUNK_ROWS if tm % CHUNK_ROWS == 0 else tm
    blocks_total = pl.cdiv(rows, tm)
    ncores = min(ncores, blocks_total)        # never split fewer blocks than cores
    bpc = pl.cdiv(blocks_total, ncores)       # row-blocks per core

    def in_index_map(c, i):
        # Clamp so the overshoot block stays in bounds; its contribution is
        # zeroed by the in-kernel row mask.
        return (jnp.minimum(c * bpc + i, blocks_total - 1), 0)

    def out_index_map(c, i):
        return (c, 0)

    kernel = functools.partial(_bin_loss_kernel, tm=tm, chunk=chunk, bpc=bpc,
                               rows_valid=rows)

    out_bytes = 2 * ncores * ACC_ROWS * LANES * 4
    cost = pl.CostEstimate(
        flops=5 * n,
        transcendentals=n,
        bytes_accessed=hard2d.size * hard2d.dtype.itemsize
        + soft2d.size * soft2d.dtype.itemsize + out_bytes)

    logsum_parts, hardsum_parts = pl.pallas_call(
        kernel,
        out_shape=(
            jax.ShapeDtypeStruct((ncores * ACC_ROWS, LANES), jnp.float32),
            jax.ShapeDtypeStruct((ncores * ACC_ROWS, LANES), jnp.float32),
        ),
        grid_spec=pltpu.PrefetchScalarGridSpec(
            num_scalar_prefetch=0,
            grid=(ncores, bpc),
            in_specs=[
                pl.BlockSpec((tm, LANES), in_index_map),
                pl.BlockSpec((tm, LANES), in_index_map),
            ],
            out_specs=(
                pl.BlockSpec((ACC_ROWS, LANES), out_index_map),
                pl.BlockSpec((ACC_ROWS, LANES), out_index_map),
            ),
        ),
        compiler_params=pltpu.CompilerParams(
            dimension_semantics=("parallel", "arbitrary"),
            vmem_limit_bytes=VMEM_LIMIT_BYTES),
        cost_estimate=cost,
    )(hard2d, soft2d)

    # Tiny cross-core / cross-lane combine + final divide (<= 2 x 8 x 128 elems).
    log_sum = jnp.sum(logsum_parts)
    hard_sum = jnp.sum(hardsum_parts)
    # Note: hard_sum == 0 yields inf/nan, same as the PyTorch reference.
    return -log_sum / hard_sum


def _reference(hard, soft):
    hard = jnp.asarray(hard, jnp.float32)
    soft = jnp.asarray(soft, jnp.float32)
    mask = hard == 1.0
    logs = jnp.where(mask, jnp.log(jnp.maximum(soft, 1e-12)), 0.0)
    return -jnp.sum(logs) / jnp.sum(hard)


if __name__ == "__main__":
    key = jax.random.PRNGKey(0)
    k1, k2 = jax.random.split(key)

    B, C, H, W = 2, 4, 16, 16  # NCHW attention maps
    # hard attention: binary 0/1 mask
    hard_attention = (jax.random.uniform(k1, (B, C, H, W)) > 0.5).astype(jnp.float32)
    # soft attention: values in (0, 1)
    soft_attention = jax.random.uniform(k2, (B, C, H, W), minval=1e-4, maxval=1.0)

    loss = bin_loss(hard_attention, soft_attention)
    loss = jax.block_until_ready(loss)

    ref = _reference(hard_attention, soft_attention)
    assert jnp.allclose(loss, ref, rtol=1e-5, atol=1e-5), (loss, ref)

    print("KERNEL_OK")
</pallas_src>

<mosaic_0001>
module attributes {stable_mosaic.version = 11 : i64} {
  func.func @_bin_loss_kernel(%arg0: i32, %arg1: i32, %arg2: memref<16x128xf32, #tpu.memory_space<vmem>>, %arg3: memref<16x128xf32, #tpu.memory_space<vmem>>, %arg4: memref<8x128xf32, #tpu.memory_space<vmem>>, %arg5: memref<8x128xf32, #tpu.memory_space<vmem>>) attributes {dimension_semantics = [#tpu.dimension_semantics<parallel>, #tpu.dimension_semantics<arbitrary>], iteration_bounds = array<i64: 1, 1>, scalar_prefetch = 0 : i64, scratch_operands = 0 : i64, tpu.core_type = #tpu.core_type<tc>, window_params = [{transform_indices = @transform_0, window_bounds = array<i64: 16, 128>}, {transform_indices = @transform_1, window_bounds = array<i64: 16, 128>}, {transform_indices = @transform_2, window_bounds = array<i64: 8, 128>}, {transform_indices = @transform_3, window_bounds = array<i64: 8, 128>}]} {
    %c0_i32 = arith.constant 0 : i32
    %0 = arith.cmpi eq, %arg1, %c0_i32 : i32
    %1 = arith.extui %0 : i1 to i32
    %c0_i32_0 = arith.constant 0 : i32
    %2 = arith.cmpi ne, %1, %c0_i32_0 : i32
    scf.if %2 {
      %cst = arith.constant 0.000000e+00 : f32
      %13 = vector.broadcast %cst : f32 to vector<8x128xf32>
      %c0 = arith.constant 0 : index
      %c0_5 = arith.constant 0 : index
      %14 = vector.load %arg4[%c0, %c0_5] : memref<8x128xf32, #tpu.memory_space<vmem>>, vector<8x128xf32>
      tpu.vector_store %arg4[%c0, %c0_5], %13 {strides = array<i32>} : memref<8x128xf32, #tpu.memory_space<vmem>>, vector<8x128xf32>,
      %cst_6 = arith.constant 0.000000e+00 : f32
      %15 = vector.broadcast %cst_6 : f32 to vector<8x128xf32>
      %c0_7 = arith.constant 0 : index
      %c0_8 = arith.constant 0 : index
      %16 = vector.load %arg5[%c0_7, %c0_8] : memref<8x128xf32, #tpu.memory_space<vmem>>, vector<8x128xf32>
      tpu.vector_store %arg5[%c0_7, %c0_8], %15 {strides = array<i32>} : memref<8x128xf32, #tpu.memory_space<vmem>>, vector<8x128xf32>,
    } else {
    }
    %c1_i32 = arith.constant 1 : i32
    %3 = arith.muli %arg0, %c1_i32 : i32
    %4 = arith.addi %3, %arg1 : i32
    %c16_i32 = arith.constant 16 : i32
    %5 = arith.muli %4, %c16_i32 : i32
    %c16_i32_1 = arith.constant 16 : i32
    %6 = arith.addi %5, %c16_i32_1 : i32
    %c16_i32_2 = arith.constant 16 : i32
    %7 = arith.cmpi sle, %6, %c16_i32_2 : i32
    %8 = arith.extui %7 : i1 to i32
    %c0_i32_3 = arith.constant 0 : i32
    %9 = arith.cmpi ne, %8, %c0_i32_3 : i32
    scf.if %9 {
      %c0 = arith.constant 0 : index
      %c0_5 = arith.constant 0 : index
      %13 = vector.load %arg2[%c0, %c0_5] : memref<16x128xf32, #tpu.memory_space<vmem>>, vector<16x128xf32>
      %c0_6 = arith.constant 0 : index
      %c0_7 = arith.constant 0 : index
      %14 = vector.load %arg3[%c0_6, %c0_7] : memref<16x128xf32, #tpu.memory_space<vmem>>, vector<16x128xf32>
      %cst = arith.constant 9.99999996E-13 : f32
      %15 = vector.broadcast %cst : f32 to vector<16x128xf32>
      %16 = arith.maximumf %14, %15 : vector<16x128xf32>
      %17 = math.log %16 : vector<16x128xf32>
      %cst_8 = arith.constant 1.000000e+00 : f32
      %18 = vector.broadcast %cst_8 : f32 to vector<16x128xf32>
      %19 = arith.cmpf oeq, %13, %18 : vector<16x128xf32>
      %cst_9 = arith.constant 0.000000e+00 : f32
      %20 = vector.broadcast %cst_9 : f32 to vector<16x128xf32>
      %21 = arith.select %19, %17, %20 : vector<16x128xi1>, vector<16x128xf32>
      %22 = vector.shape_cast %21 : vector<16x128xf32> to vector<2x8x128xf32>
      %cst_10 = arith.constant dense<0.000000e+00> : vector<8x128xf32>
      %23 = vector.multi_reduction <add>, %22, %cst_10 [0] : vector<2x8x128xf32> to vector<8x128xf32>
      %24 = vector.shape_cast %13 : vector<16x128xf32> to vector<2x8x128xf32>
      %cst_11 = arith.constant dense<0.000000e+00> : vector<8x128xf32>
      %25 = vector.multi_reduction <add>, %24, %cst_11 [0] : vector<2x8x128xf32> to vector<8x128xf32>
      %c0_12 = arith.constant 0 : index
      %c0_13 = arith.constant 0 : index
      %26 = vector.load %arg4[%c0_12, %c0_13] : memref<8x128xf32, #tpu.memory_space<vmem>>, vector<8x128xf32>
      %27 = arith.addf %26, %23 : vector<8x128xf32>
      %c0_14 = arith.constant 0 : index
      %c0_15 = arith.constant 0 : index
      %28 = vector.load %arg4[%c0_14, %c0_15] : memref<8x128xf32, #tpu.memory_space<vmem>>, vector<8x128xf32>
      tpu.vector_store %arg4[%c0_14, %c0_15], %27 {strides = array<i32>} : memref<8x128xf32, #tpu.memory_space<vmem>>, vector<8x128xf32>,
      %c0_16 = arith.constant 0 : index
      %c0_17 = arith.constant 0 : index
      %29 = vector.load %arg5[%c0_16, %c0_17] : memref<8x128xf32, #tpu.memory_space<vmem>>, vector<8x128xf32>
      %30 = arith.addf %29, %25 : vector<8x128xf32>
      %c0_18 = arith.constant 0 : index
      %c0_19 = arith.constant 0 : index
      %31 = vector.load %arg5[%c0_18, %c0_19] : memref<8x128xf32, #tpu.memory_space<vmem>>, vector<8x128xf32>
      tpu.vector_store %arg5[%c0_18, %c0_19], %30 {strides = array<i32>} : memref<8x128xf32, #tpu.memory_space<vmem>>, vector<8x128xf32>,
    } else {
    }
    %true = arith.constant true
    %10 = arith.xori %7, %true : i1
    %11 = arith.extui %10 : i1 to i32
    %c0_i32_4 = arith.constant 0 : i32
    %12 = arith.cmpi ne, %11, %c0_i32_4 : i32
    scf.if %12 {
      %c0 = arith.constant 0 : index
      %c0_5 = arith.constant 0 : index
      %13 = vector.load %arg2[%c0, %c0_5] : memref<16x128xf32, #tpu.memory_space<vmem>>, vector<16x128xf32>
      %c0_6 = arith.constant 0 : index
      %c0_7 = arith.constant 0 : index
      %14 = vector.load %arg3[%c0_6, %c0_7] : memref<16x128xf32, #tpu.memory_space<vmem>>, vector<16x128xf32>
      %cst = arith.constant 9.99999996E-13 : f32
      %15 = vector.broadcast %cst : f32 to vector<16x128xf32>
      %16 = arith.maximumf %14, %15 : vector<16x128xf32>
      %17 = math.log %16 : vector<16x128xf32>
      %cst_8 = arith.constant 1.000000e+00 : f32
      %18 = vector.broadcast %cst_8 : f32 to vector<16x128xf32>
      %19 = arith.cmpf oeq, %13, %18 : vector<16x128xf32>
      %c0_i32_9 = arith.constant 0 : i32
      %20 = arith.addi %5, %c0_i32_9 : i32
      %c16_i32_10 = arith.constant 16 : i32
      %21 = arith.subi %c16_i32_10, %20 : i32
      %22 = tpu.iota {dimensions = array<i32: 0>} : vector<16x128xi32>
      %23 = vector.broadcast %21 : i32 to vector<16x128xi32>
      %24 = arith.cmpi slt, %22, %23 : vector<16x128xi32>
      %25 = arith.andi %19, %24 : vector<16x128xi1>
      %cst_11 = arith.constant 0.000000e+00 : f32
      %26 = vector.broadcast %cst_11 : f32 to vector<16x128xf32>
      %27 = arith.select %24, %13, %26 : vector<16x128xi1>, vector<16x128xf32>
      %cst_12 = arith.constant 0.000000e+00 : f32
      %28 = vector.broadcast %cst_12 : f32 to vector<16x128xf32>
      %29 = arith.select %25, %17, %28 : vector<16x128xi1>, vector<16x128xf32>
      %30 = vector.shape_cast %29 : vector<16x128xf32> to vector<2x8x128xf32>
      %cst_13 = arith.constant dense<0.000000e+00> : vector<8x128xf32>
      %31 = vector.multi_reduction <add>, %30, %cst_13 [0] : vector<2x8x128xf32> to vector<8x128xf32>
      %32 = vector.shape_cast %27 : vector<16x128xf32> to vector<2x8x128xf32>
      %cst_14 = arith.constant dense<0.000000e+00> : vector<8x128xf32>
      %33 = vector.multi_reduction <add>, %32, %cst_14 [0] : vector<2x8x128xf32> to vector<8x128xf32>
      %c0_15 = arith.constant 0 : index
      %c0_16 = arith.constant 0 : index
      %34 = vector.load %arg4[%c0_15, %c0_16] : memref<8x128xf32, #tpu.memory_space<vmem>>, vector<8x128xf32>
      %35 = arith.addf %34, %31 : vector<8x128xf32>
      %c0_17 = arith.constant 0 : index
      %c0_18 = arith.constant 0 : index
      %36 = vector.load %arg4[%c0_17, %c0_18] : memref<8x128xf32, #tpu.memory_space<vmem>>, vector<8x128xf32>
      tpu.vector_store %arg4[%c0_17, %c0_18], %35 {strides = array<i32>} : memref<8x128xf32, #tpu.memory_space<vmem>>, vector<8x128xf32>,
      %c0_19 = arith.constant 0 : index
      %c0_20 = arith.constant 0 : index
      %37 = vector.load %arg5[%c0_19, %c0_20] : memref<8x128xf32, #tpu.memory_space<vmem>>, vector<8x128xf32>
      %38 = arith.addf %37, %33 : vector<8x128xf32>
      %c0_21 = arith.constant 0 : index
      %c0_22 = arith.constant 0 : index
      %39 = vector.load %arg5[%c0_21, %c0_22] : memref<8x128xf32, #tpu.memory_space<vmem>>, vector<8x128xf32>
      tpu.vector_store %arg5[%c0_21, %c0_22], %38 {strides = array<i32>} : memref<8x128xf32, #tpu.memory_space<vmem>>, vector<8x128xf32>,
    } else {
    }
    return
  }
  func.func @transform_0(%arg0: i32, %arg1: i32) -> (i32, i32) {
    %c1_i32 = arith.constant 1 : i32
    %0 = arith.muli %arg0, %c1_i32 : i32
    %1 = arith.addi %0, %arg1 : i32
    %c0_i32 = arith.constant 0 : i32
    %2 = arith.minsi %1, %c0_i32 : i32
    %c0_i32_0 = arith.constant 0 : i32
    %c0_i32_1 = arith.constant 0 : i32
    return %2, %c0_i32_0 : i32, i32
  }
  func.func @transform_1(%arg0: i32, %arg1: i32) -> (i32, i32) {
    %c1_i32 = arith.constant 1 : i32
    %0 = arith.muli %arg0, %c1_i32 : i32
    %1 = arith.addi %0, %arg1 : i32
    %c0_i32 = arith.constant 0 : i32
    %2 = arith.minsi %1, %c0_i32 : i32
    %c0_i32_0 = arith.constant 0 : i32
    %c0_i32_1 = arith.constant 0 : i32
    return %2, %c0_i32_0 : i32, i32
  }
  func.func @transform_2(%arg0: i32, %arg1: i32) -> (i32, i32) {
    %c0_i32 = arith.constant 0 : i32
    %c0_i32_0 = arith.constant 0 : i32
    return %arg0, %c0_i32 : i32, i32
  }
  func.func @transform_3(%arg0: i32, %arg1: i32) -> (i32, i32) {
    %c0_i32 = arith.constant 0 : i32
    %c0_i32_0 = arith.constant 0 : i32
    return %arg0, %c0_i32 : i32, i32
  }
}

</mosaic_0001>

<llo_original>
// kernel: tpu_custom_call.1
$region0: #{tpu_custom_call.1}
  #allocation0 [shape = 'u32[]', space=smem, size = 0x4, offset = 0x4, fixed_abs, tag = 'smem constant byte address 0x4 - core index']
  #allocation1 [shape = 'u32[72,128]{1,0:T(1,128)}', space=vmem, size = 0x9000, scoped, tag = 'internal scratch']
  %s0 = inlined_call_operand.hbm [shape: f32[16,128], index: 0, kind: input, shape index: {}]
  %s1 = inlined_call_operand.hbm [shape: f32[16,128], index: 1, kind: input, shape index: {}]
  %s2 = inlined_call_operand.hbm [shape: f32[8,128], index: 2, kind: output, shape index: {0}]
  %s3 = inlined_call_operand.hbm [shape: f32[8,128], index: 3, kind: output, shape index: {1}]
  %4 = xla_tuple %s2, %s3
  %s5 = sld [smem:[#allocation0]]
  $region46: #{tpu_custom_call.1} parent=0
    _
  %s7 = ssub.s32 1, %s5
  %s8 = scalar_select 0, %s7, %s5
  $region1: #{tpu_custom_call.1} parent=0
    #allocation2 [shape = 'u8[8192]{0}', space=vmem, size = 0x2000, scoped, tag = 'input window, operand 0, single buffered']
    #allocation3 [shape = 's32[1]{0}', space=sflag, size = 0x4, scoped, tag = 'scoped memory for tpu_custom_call.1']
    #allocation4 [shape = 's32[1]{0}', space=sflag, size = 0x4, scoped, tag = 'scoped memory for tpu_custom_call.1']
    #allocation5 [shape = 'u8[8192]{0}', space=vmem, size = 0x2000, scoped, tag = 'input window, operand 1, single buffered']
    #allocation6 [shape = 's32[1]{0}', space=sflag, size = 0x4, scoped, tag = 'scoped memory for tpu_custom_call.1']
    #allocation7 [shape = 'u8[4096]{0}', space=vmem, size = 0x1000, scoped, tag = 'output window, operand 0, single buffered']
    #allocation8 [shape = 'u8[4096]{0}', space=vmem, size = 0x1000, scoped, tag = 'output window, operand 1, single buffered']
    #allocation9 [shape = 's32[1]{0}', space=sflag, size = 0x4, scoped, tag = 'scoped memory for tpu_custom_call.1']
    %9 = vsyncpa [#allocation3], 0
    %10 = vsyncpa [#allocation6], 0
    %11 = vsyncpa [#allocation4], 0
    %12 = vsyncpa [#allocation9], 0
    // Predicated region
    $region2: #{tpu_custom_call.1} parent=1 // pred_check
      _
    $region3: #{tpu_custom_call.1} parent=1 // pred_check_branch
      %14 = sbr.rel (0) target = $region5
    $region4: #{tpu_custom_call.1} parent=1 // pred_region
      %s15 = sadd.s32 0, 0
      %p16 = scmp.lt.s32.totalorder %s15, 0
      %s17 = scalar_select %p16, %s15, 0
      %s18 = smul.u32 2, %s17
      %20 = vsyncadd [#allocation3], 0
      %s21 = smul.addr %s18, 8
      %s22 = scalar_lea.hbm %s0, %s21
      %s23 = sshll.u32 %s22, 4
      %s24 = int_to_ptr.hbm [resolvable:$true] %s23
      %s25 = sshll.u32 [#allocation2], 4
      %s26 = int_to_ptr.vmem [resolvable:$true] %s25
      %31 = dma.hbm_to_vmem [thread:$0]  %s24, 256, %s26, [#allocation3], 128, 128, 8
    $region5: #{tpu_custom_call.1} parent=1 // pred_fallthru
      _
    // Predicated region
    $region6: #{tpu_custom_call.1} parent=1 // pred_check
      _
    $region7: #{tpu_custom_call.1} parent=1 // pred_check_branch
      %33 = sbr.rel (0) target = $region9
    $region8: #{tpu_custom_call.1} parent=1 // pred_region
      %s34 = sadd.s32 0, 0
      %p35 = scmp.lt.s32.totalorder %s34, 0
      %s36 = scalar_select %p35, %s34, 0
      %s37 = smul.u32 2, %s36
      %39 = vsyncadd [#allocation6], 0
      %s40 = smul.addr %s37, 8
      %s41 = scalar_lea.hbm %s1, %s40
      %s42 = sshll.u32 %s41, 4
      %s43 = int_to_ptr.hbm [resolvable:$true] %s42
      %s44 = sshll.u32 [#allocation5], 4
      %s45 = int_to_ptr.vmem [resolvable:$true] %s44
      %50 = dma.hbm_to_vmem [thread:$0]  %s43, 256, %s45, [#allocation6], 128, 128, 8
    $region9: #{tpu_custom_call.1} parent=1 // pred_fallthru
      _
    // Predicated region
    $region10: #{tpu_custom_call.1} parent=1 // pred_check
      _
    $region11: #{tpu_custom_call.1} parent=1 // pred_check_branch
      %52 = sbr.rel (0) target = $region13
    $region12: #{tpu_custom_call.1} parent=1 // pred_region
      %54 = dma.done [#allocation3], 256
    $region13: #{tpu_custom_call.1} parent=1 // pred_fallthru
      _
    // Predicated region
    $region14: #{tpu_custom_call.1} parent=1 // pred_check
      _
    $region15: #{tpu_custom_call.1} parent=1 // pred_check_branch
      %56 = sbr.rel (0) target = $region17
    $region16: #{tpu_custom_call.1} parent=1 // pred_region
      %58 = dma.done [#allocation6], 256
    $region17: #{tpu_custom_call.1} parent=1 // pred_fallthru
      _
    %s59 = sadd.s32 0, 0
    %p60 = scmp.lt.s32.totalorder %s59, 0
    %s61 = scalar_select %p60, %s59, 0
    %s62 = smul.u32 2, %s61
    %s63 = sadd.s32 0, 0
    %p64 = scmp.lt.s32.totalorder %s63, 0
    %s65 = scalar_select %p64, %s63, 0
    %s66 = smul.u32 2, %s65
    %p67 = scmp.eq.s32.totalorder 0, 0
    // Predicated region
    $region18: #{tpu_custom_call.1} parent=1 // pred_check
      %p68 = pneg %p67
    $region19: #{tpu_custom_call.1} parent=1 // pred_check_branch
      %70 = sbr.rel (%p68) target = $region21
    $region20: #{tpu_custom_call.1} parent=1 // pred_region
      %71 = vst [vmem:[#allocation7] sm:$0xff] 0.0
      %72 = vst [vmem:[#allocation8] sm:$0xff] 0.0
    $region21: #{tpu_custom_call.1} parent=1 // pred_fallthru
      _
    %s73 = sadd.s32 0, 0
    %s74 = smul.u32 %s73, 16
    %s75 = sadd.s32 %s74, 16
    %p76 = scmp.le.s32.totalorder %s75, 16
    // Predicated region
    $region22: #{tpu_custom_call.1} parent=1 // pred_check
      %p77 = pneg %p76
    $region23: #{tpu_custom_call.1} parent=1 // pred_check_branch
      %79 = sbr.rel (%p77) target = $region25
    $region24: #{tpu_custom_call.1} parent=1 // pred_region
      %v80 = vld [vmem:[#allocation2] sm:$0xff]
      %v81 = vld [vmem:[#allocation2 + $0x8] sm:$0xff]
      %v82 = vld [vmem:[#allocation5] sm:$0xff]
      %v83 = vld [vmem:[#allocation5 + $0x8] sm:$0xff]
      %v84 = vmax.f32 %v82, 1e-12
      %v85 = vmax.f32 %v83, 1e-12
      %v86 = vlog2.pop %v84
      %v87 = vmul.f32 %v86, 0.6931472
      %v88 = vlog2.pop %v85
      %v89 = vmul.f32 %v88, 0.6931472
      %vm90 = vcmp.eq.f32.partialorder %v80, 1.0
      %vm91 = vcmp.eq.f32.partialorder %v81, 1.0
      %v92 = vsel %vm90, %v87, 0.0
      %v93 = vsel %vm91, %v89, 0.0
      %v94 = vadd.f32 %v92, %v93
      %v95 = vadd.f32 %v80, %v81
      %v96 = vld [vmem:[#allocation7] sm:$0xff]
      %v97 = vadd.f32 %v96, %v94
      %98 = vst [vmem:[#allocation7] sm:$0xff] %v97
      %v99 = vld [vmem:[#allocation8] sm:$0xff]
      %v100 = vadd.f32 %v99, %v95
      %101 = vst [vmem:[#allocation8] sm:$0xff] %v100
    $region25: #{tpu_custom_call.1} parent=1 // pred_fallthru
      _
    %p102 = scmp.gt.s32.totalorder %s75, 16
    // Predicated region
    $region26: #{tpu_custom_call.1} parent=1 // pred_check
      %p103 = pneg %p102
    $region27: #{tpu_custom_call.1} parent=1 // pred_check_branch
      %105 = sbr.rel (%p103) target = $region29
    $region28: #{tpu_custom_call.1} parent=1 // pred_region
      %v106 = vld [vmem:[#allocation2] sm:$0xff]
      %v107 = vld [vmem:[#allocation2 + $0x8] sm:$0xff]
      %v108 = vld [vmem:[#allocation5] sm:$0xff]
      %v109 = vld [vmem:[#allocation5 + $0x8] sm:$0xff]
      %v110 = vmax.f32 %v108, 1e-12
      %v111 = vmax.f32 %v109, 1e-12
      %v112 = vlog2.pop %v110
      %v113 = vmul.f32 %v112, 0.6931472
      %v114 = vlog2.pop %v111
      %v115 = vmul.f32 %v114, 0.6931472
      %vm116 = vcmp.eq.f32.partialorder %v106, 1.0
      %vm117 = vcmp.eq.f32.partialorder %v107, 1.0
      %s118 = ssub.s32 16, %s74
      %v119 = vlaneseq
      %v120 = vshrl.u32 %v119, 7
      %v121 = vadd.s32 %v120, 8
      %v122 = vstv %s118
      %vm123 = vcmp.lt.s32.totalorder %v120, %v122
      %vm124 = vcmp.lt.s32.totalorder %v121, %v122
      %vm125 = vmand %vm116, %vm123
      %vm126 = vmand %vm117, %vm124
      %v127 = vsel %vm123, %v106, 0.0
      %v128 = vsel %vm124, %v107, 0.0
      %v129 = vsel %vm125, %v113, 0.0
      %v130 = vsel %vm126, %v115, 0.0
      %v131 = vadd.f32 %v129, %v130
      %v132 = vadd.f32 %v127, %v128
      %v133 = vld [vmem:[#allocation7] sm:$0xff]
      %v134 = vadd.f32 %v133, %v131
      %135 = vst [vmem:[#allocation7] sm:$0xff] %v134
      %v136 = vld [vmem:[#allocation8] sm:$0xff]
      %v137 = vadd.f32 %v136, %v132
      %138 = vst [vmem:[#allocation8] sm:$0xff] %v137
    $region29: #{tpu_custom_call.1} parent=1 // pred_fallthru
      _
    // Predicated region
    $region30: #{tpu_custom_call.1} parent=1 // pred_check
      _
    $region31: #{tpu_custom_call.1} parent=1 // pred_check_branch
      %140 = sbr.rel (0) target = $region33
    $region32: #{tpu_custom_call.1} parent=1 // pred_region
      %142 = vsyncadd [#allocation4], 0
      %s144 = sshll.u32 [#allocation7], 4
      %s145 = int_to_ptr.vmem [resolvable:$true] %s144
      %s146 = sshll.u32 %s2, 4
      %s147 = int_to_ptr.hbm [resolvable:$true] %s146
      %149 = dma.vmem_to_hbm [thread:$0]  %s145, 128, %s147, [#allocation4]
    $region33: #{tpu_custom_call.1} parent=1 // pred_fallthru
      _
    // Predicated region
    $region34: #{tpu_custom_call.1} parent=1 // pred_check
      _
    $region35: #{tpu_custom_call.1} parent=1 // pred_check_branch
      %151 = sbr.rel (0) target = $region37
    $region36: #{tpu_custom_call.1} parent=1 // pred_region
      %153 = vsyncadd [#allocation9], 0
      %s155 = sshll.u32 [#allocation8], 4
      %s156 = int_to_ptr.vmem [resolvable:$true] %s155
      %s157 = sshll.u32 %s3, 4
      %s158 = int_to_ptr.hbm [resolvable:$true] %s157
      %160 = dma.vmem_to_hbm [thread:$0]  %s156, 128, %s158, [#allocation9]
    $region37: #{tpu_custom_call.1} parent=1 // pred_fallthru
      _
    // Predicated region
    $region38: #{tpu_custom_call.1} parent=1 // pred_check
      _
    $region39: #{tpu_custom_call.1} parent=1 // pred_check_branch
      %162 = sbr.rel (0) target = $region41
    $region40: #{tpu_custom_call.1} parent=1 // pred_region
      %164 = dma.done [#allocation4], 128
    $region41: #{tpu_custom_call.1} parent=1 // pred_fallthru
      _
    // Predicated region
    $region42: #{tpu_custom_call.1} parent=1 // pred_check
      _
    $region43: #{tpu_custom_call.1} parent=1 // pred_check_branch
      %166 = sbr.rel (0) target = $region45
    $region44: #{tpu_custom_call.1} parent=1 // pred_region
      %168 = dma.done [#allocation9], 128
    $region45: #{tpu_custom_call.1} parent=1 // pred_fallthru
      _
    %169 = vsyncpa [#allocation3], 1
    %170 = vsyncpa [#allocation6], 1
    %171 = vsyncpa [#allocation4], 1
    %172 = vsyncpa [#allocation9], 1

</llo_original>
